<compile_context>
chip_gen: v7x
topology: tpu7x:2x2x1
jax: 0.10.0
libtpu: 0.0.40
codegen_flags: <defaults>
</compile_context>

<pallas_src>
import functools

import jax
import jax.numpy as jnp
from jax.experimental import pallas as pl
from jax.experimental.pallas import tpu as pltpu


def _round_up(x: int, m: int) -> int:
    return ((x + m - 1) // m) * m


def _unembed_kernel(e_ref, w_ref, o_ref, acc_ref):
    # e_ref: (tm, tk), w_ref: (tk, tv), o_ref: (tm, tv), acc_ref: (tm, tv) f32
    k = pl.program_id(2)

    @pl.when(k == 0)
    def _():
        acc_ref[...] = jnp.zeros_like(acc_ref)

    acc_ref[...] += jnp.dot(
        e_ref[...], w_ref[...], preferred_element_type=jnp.float32
    )

    @pl.when(k == pl.num_programs(2) - 1)
    def _():
        o_ref[...] = acc_ref[...].astype(o_ref.dtype)


@functools.partial(jax.jit, static_argnames=("tm", "tv", "tk"))
def unembed(
    embedding: jax.Array,
    param: jax.Array,
    *,
    tm: int = 256,
    tv: int = 512,
    tk: int = 512,
):
    """Computes einsum('bnd,dv->bnv', embedding, param) with a Pallas matmul."""
    n_batch, n_tokens, d_model = embedding.shape
    d_model2, n_vocab = param.shape
    assert d_model == d_model2
    M = n_batch * n_tokens
    e2d = embedding.reshape(M, d_model)

    # Clamp tiles to (padded) problem size while keeping TPU-friendly alignment:
    #  - tm is a sublane dim in both activation and output blocks -> multiple of 8
    #  - tk / tv appear as lane dims -> multiples of 128
    tm = min(tm, _round_up(M, 8))
    tk = min(tk, _round_up(d_model, 128))
    tv = min(tv, _round_up(n_vocab, 128))

    Mp = _round_up(M, tm)
    Kp = _round_up(d_model, tk)
    Vp = _round_up(n_vocab, tv)

    if (Mp, Kp) != (M, d_model):
        e2d = jnp.pad(e2d, ((0, Mp - M), (0, Kp - d_model)))
    w = param
    if (Kp, Vp) != (d_model, n_vocab):
        w = jnp.pad(w, ((0, Kp - d_model), (0, Vp - n_vocab)))

    grid = (Mp // tm, Vp // tv, Kp // tk)

    itemsize = jnp.dtype(embedding.dtype).itemsize
    # Double-buffered input/output tiles + f32 accumulator, with margin.
    vmem_est = 2 * (tm * tk + tk * tv + tm * tv) * itemsize + tm * tv * 4
    vmem_limit = min(max(int(vmem_est * 1.5), 32 * 1024 * 1024), 120 * 1024 * 1024)

    cost = pl.CostEstimate(
        flops=2 * Mp * Kp * Vp,
        transcendentals=0,
        bytes_accessed=(
            (Vp // tv) * Mp * Kp * itemsize      # activation re-streamed per vocab tile
            + (Mp // tm) * Kp * Vp * itemsize    # weight re-streamed per M tile
            + Mp * Vp * itemsize                 # logits written once
        ),
    )

    out2d = pl.pallas_call(
        _unembed_kernel,
        out_shape=jax.ShapeDtypeStruct((Mp, Vp), embedding.dtype),
        grid_spec=pltpu.PrefetchScalarGridSpec(
            num_scalar_prefetch=0,
            grid=grid,
            in_specs=[
                pl.BlockSpec((tm, tk), lambda i, j, k: (i, k)),
                pl.BlockSpec((tk, tv), lambda i, j, k: (k, j)),
            ],
            out_specs=pl.BlockSpec((tm, tv), lambda i, j, k: (i, j)),
            scratch_shapes=[pltpu.VMEM((tm, tv), jnp.float32)],
        ),
        compiler_params=pltpu.CompilerParams(
            dimension_semantics=("parallel", "parallel", "arbitrary"),
            vmem_limit_bytes=vmem_limit,
        ),
        cost_estimate=cost,
    )(e2d, w)

    out2d = out2d[:M, :n_vocab]
    return out2d.reshape(n_batch, n_tokens, n_vocab)


if __name__ == "__main__":
    key = jax.random.PRNGKey(0)
    k_emb, k_w, k_emb2, k_w2 = jax.random.split(key, 4)

    # Small shapes consistent with the module.
    n_batch, n_tokens, d_model, n_vocab = 2, 8, 32, 128
    embedding = jax.random.normal(
        k_emb, (n_batch, n_tokens, d_model), dtype=jnp.float32
    )
    # Deterministic parameter init (PyTorch module uses torch.empty; we fill it).
    param = jax.random.normal(k_w, (d_model, n_vocab), dtype=jnp.float32) * 0.02

    logits = unembed(embedding, param)
    jax.block_until_ready(logits)

    ref = jnp.einsum("bnd,dv->bnv", embedding, param)
    assert logits.shape == (n_batch, n_tokens, n_vocab)
    assert jnp.allclose(logits, ref, atol=1e-4, rtol=1e-4)

    # Second check with ragged (non tile-divisible) shapes to exercise padding.
    b2, t2, d2, v2 = 2, 5, 48, 200
    emb2 = jax.random.normal(k_emb2, (b2, t2, d2), dtype=jnp.float32)
    w2 = jax.random.normal(k_w2, (d2, v2), dtype=jnp.float32) * 0.02
    logits2 = unembed(emb2, w2)
    jax.block_until_ready(logits2)
    ref2 = jnp.einsum("bnd,dv->bnv", emb2, w2)
    assert logits2.shape == (b2, t2, v2)
    assert jnp.allclose(logits2, ref2, atol=1e-4, rtol=1e-4)

    print("KERNEL_OK")
</pallas_src>

<mosaic_0001>
module attributes {stable_mosaic.version = 11 : i64} {
  func.func @_unembed_kernel(%arg0: i32, %arg1: i32, %arg2: i32, %arg3: memref<16x128xf32, #tpu.memory_space<vmem>>, %arg4: memref<128x128xf32, #tpu.memory_space<vmem>>, %arg5: memref<16x128xf32, #tpu.memory_space<vmem>>, %arg6: memref<16x128xf32, #tpu.memory_space<vmem>>) attributes {dimension_semantics = [#tpu.dimension_semantics<parallel>, #tpu.dimension_semantics<parallel>, #tpu.dimension_semantics<arbitrary>], iteration_bounds = array<i64: 1, 1, 1>, scalar_prefetch = 0 : i64, scratch_operands = 1 : i64, tpu.core_type = #tpu.core_type<tc>, window_params = [{transform_indices = @transform_0, window_bounds = array<i64: 16, 128>}, {transform_indices = @transform_1, window_bounds = array<i64: 128, 128>}, {transform_indices = @transform_2, window_bounds = array<i64: 16, 128>}]} {
    %c0_i32 = arith.constant 0 : i32
    %0 = arith.cmpi eq, %arg2, %c0_i32 : i32
    %1 = arith.extui %0 : i1 to i32
    %c0_i32_0 = arith.constant 0 : i32
    %2 = arith.cmpi ne, %1, %c0_i32_0 : i32
    scf.if %2 {
      %cst_10 = arith.constant 0.000000e+00 : f32
      %12 = vector.broadcast %cst_10 : f32 to vector<16x128xf32>
      %c0_11 = arith.constant 0 : index
      %c0_12 = arith.constant 0 : index
      %13 = vector.load %arg6[%c0_11, %c0_12] : memref<16x128xf32, #tpu.memory_space<vmem>>, vector<16x128xf32>
      tpu.vector_store %arg6[%c0_11, %c0_12], %12 {strides = array<i32>} : memref<16x128xf32, #tpu.memory_space<vmem>>, vector<16x128xf32>,
    } else {
    }
    %c0 = arith.constant 0 : index
    %c0_1 = arith.constant 0 : index
    %3 = vector.load %arg6[%c0, %c0_1] : memref<16x128xf32, #tpu.memory_space<vmem>>, vector<16x128xf32>
    %c0_2 = arith.constant 0 : index
    %c0_3 = arith.constant 0 : index
    %4 = vector.load %arg3[%c0_2, %c0_3] : memref<16x128xf32, #tpu.memory_space<vmem>>, vector<16x128xf32>
    %c0_4 = arith.constant 0 : index
    %c0_5 = arith.constant 0 : index
    %5 = vector.load %arg4[%c0_4, %c0_5] : memref<128x128xf32, #tpu.memory_space<vmem>>, vector<128x128xf32>
    %cst = arith.constant dense<0.000000e+00> : vector<16x128xf32>
    %6 = tpu.matmul %4, %5, %cst {dimension_numbers = #tpu.dot_dimension_numbers<[1], [0], [0], [1], [0, 0, 1, 1], [], []>} : vector<16x128xf32>, vector<128x128xf32>, vector<16x128xf32> -> vector<16x128xf32>
    %7 = arith.addf %3, %6 : vector<16x128xf32>
    %c0_6 = arith.constant 0 : index
    %c0_7 = arith.constant 0 : index
    %8 = vector.load %arg6[%c0_6, %c0_7] : memref<16x128xf32, #tpu.memory_space<vmem>>, vector<16x128xf32>
    tpu.vector_store %arg6[%c0_6, %c0_7], %7 {strides = array<i32>} : memref<16x128xf32, #tpu.memory_space<vmem>>, vector<16x128xf32>,
    %c0_i32_8 = arith.constant 0 : i32
    %9 = arith.cmpi eq, %arg2, %c0_i32_8 : i32
    %10 = arith.extui %9 : i1 to i32
    %c0_i32_9 = arith.constant 0 : i32
    %11 = arith.cmpi ne, %10, %c0_i32_9 : i32
    scf.if %11 {
      %c0_10 = arith.constant 0 : index
      %c0_11 = arith.constant 0 : index
      %12 = vector.load %arg6[%c0_10, %c0_11] : memref<16x128xf32, #tpu.memory_space<vmem>>, vector<16x128xf32>
      %c0_12 = arith.constant 0 : index
      %c0_13 = arith.constant 0 : index
      %13 = vector.load %arg5[%c0_12, %c0_13] : memref<16x128xf32, #tpu.memory_space<vmem>>, vector<16x128xf32>
      tpu.vector_store %arg5[%c0_12, %c0_13], %12 {strides = array<i32>} : memref<16x128xf32, #tpu.memory_space<vmem>>, vector<16x128xf32>,
    } else {
    }
    return
  }
  func.func @transform_0(%arg0: i32, %arg1: i32, %arg2: i32) -> (i32, i32) {
    %c0_i32 = arith.constant 0 : i32
    return %arg0, %arg2 : i32, i32
  }
  func.func @transform_1(%arg0: i32, %arg1: i32, %arg2: i32) -> (i32, i32) {
    %c0_i32 = arith.constant 0 : i32
    return %arg2, %arg1 : i32, i32
  }
  func.func @transform_2(%arg0: i32, %arg1: i32, %arg2: i32) -> (i32, i32) {
    %c0_i32 = arith.constant 0 : i32
    return %arg0, %arg1 : i32, i32
  }
}

</mosaic_0001>

<llo_original>
// kernel: unembed.1
$region0: #{unembed.1}
  #allocation0 [shape = 'u32[]', space=smem, size = 0x4, offset = 0x4, fixed_abs, tag = 'smem constant byte address 0x4 - core index']
  #allocation1 [shape = 'u32[144,128]{1,0:T(1,128)}', space=vmem, size = 0x12000, scoped, tag = 'internal scratch']
  #allocation2 [shape = 'f32[16,128]{1,0:T(8,128)}', space=vmem, size = 0x2000, scoped, tag = 'scratch operand']
  %s0 = inlined_call_operand.vmem [shape: f32[16,128], index: 0, kind: input, shape index: {}]
  %s1 = inlined_call_operand.vmem [shape: f32[128,128], index: 1, kind: input, shape index: {}]
  %s2 = inlined_call_operand.hbm [shape: f32[16,128], index: 2, kind: output, shape index: {}]
  %s3 = sld [smem:[#allocation0]]
  $region26: #{unembed.1} parent=0
    _
  %s5 = ssub.s32 1, %s3
  %s6 = scalar_select 0, %s5, %s3
  $region1: #{unembed.1} parent=0
    #allocation3 [shape = 'u8[8192]{0}', space=vmem, size = 0x2000, scoped, tag = 'output window, operand 0, single buffered']
    #allocation4 [shape = 's32[1]{0}', space=sflag, size = 0x4, scoped, tag = 'scoped memory for unembed.1']
    %7 = vsyncpa [#allocation4], 0
    // Predicated region
    $region2: #{unembed.1} parent=1 // pred_check
      _
    $region3: #{unembed.1} parent=1 // pred_check_branch
      %9 = sbr.rel (0) target = $region5
    $region4: #{unembed.1} parent=1 // pred_region
      _
    $region5: #{unembed.1} parent=1 // pred_fallthru
      _
    // Predicated region
    $region6: #{unembed.1} parent=1 // pred_check
      _
    $region7: #{unembed.1} parent=1 // pred_check_branch
      %11 = sbr.rel (0) target = $region9
    $region8: #{unembed.1} parent=1 // pred_region
      _
    $region9: #{unembed.1} parent=1 // pred_fallthru
      _
    %p12 = scmp.eq.s32.totalorder 0, 0
    // Predicated region
    $region10: #{unembed.1} parent=1 // pred_check
      %p13 = pneg %p12
    $region11: #{unembed.1} parent=1 // pred_check_branch
      %15 = sbr.rel (%p13) target = $region13
    $region12: #{unembed.1} parent=1 // pred_region
      %16 = vst [vmem:[#allocation2] sm:$0xff] 0.0
      %17 = vst [vmem:[#allocation2 + $0x8] sm:$0xff] 0.0
    $region13: #{unembed.1} parent=1 // pred_fallthru
      _
    %v18 = vld [vmem:[#allocation2] sm:$0xff]
    %v19 = vld [vmem:[#allocation2 + $0x8] sm:$0xff]
    %v20 = vld [vmem:[%s0] sm:$0xff]
    %v21 = vld [vmem:[%s0 + $0x8] sm:$0xff]
    %v22 = vld [vmem:[%s1] sm:$0xff]
    %v23 = vld [vmem:[%s1 + $0x8] sm:$0xff]
    %v24 = vld [vmem:[%s1 + $0x10] sm:$0xff]
    %v25 = vld [vmem:[%s1 + $0x18] sm:$0xff]
    %v26 = vld [vmem:[%s1 + $0x20] sm:$0xff]
    %v27 = vld [vmem:[%s1 + $0x28] sm:$0xff]
    %v28 = vld [vmem:[%s1 + $0x30] sm:$0xff]
    %v29 = vld [vmem:[%s1 + $0x38] sm:$0xff]
    %v30 = vld [vmem:[%s1 + $0x40] sm:$0xff]
    %v31 = vld [vmem:[%s1 + $0x48] sm:$0xff]
    %v32 = vld [vmem:[%s1 + $0x50] sm:$0xff]
    %v33 = vld [vmem:[%s1 + $0x58] sm:$0xff]
    %v34 = vld [vmem:[%s1 + $0x60] sm:$0xff]
    %v35 = vld [vmem:[%s1 + $0x68] sm:$0xff]
    %v36 = vld [vmem:[%s1 + $0x70] sm:$0xff]
    %v37 = vld [vmem:[%s1 + $0x78] sm:$0xff]
    %38 = vmatprep.subr.mxu0 0.0
    %39 = vmatpush1.msra.mxu0 %v22
    %40 = vmatprep.subr.mxu0 0.0
    %41 = vmatpush1.msra.mxu0 %v23
    %42 = vmatprep.subr.mxu0 0.0
    %43 = vmatpush1.msra.mxu0 %v24
    %44 = vmatprep.subr.mxu0 0.0
    %45 = vmatpush1.msra.mxu0 %v25
    %46 = vmatprep.subr.mxu0 0.0
    %47 = vmatpush1.msra.mxu0 %v26
    %48 = vmatprep.subr.mxu0 0.0
    %49 = vmatpush1.msra.mxu0 %v27
    %50 = vmatprep.subr.mxu0 0.0
    %51 = vmatpush1.msra.mxu0 %v28
    %52 = vmatprep.subr.mxu0 0.0
    %53 = vmatpush1.msra.mxu0 %v29
    %54 = vmatprep.subr.mxu0 0.0
    %55 = vmatpush1.msra.mxu0 %v30
    %56 = vmatprep.subr.mxu0 0.0
    %57 = vmatpush1.msra.mxu0 %v31
    %58 = vmatprep.subr.mxu0 0.0
    %59 = vmatpush1.msra.mxu0 %v32
    %60 = vmatprep.subr.mxu0 0.0
    %61 = vmatpush1.msra.mxu0 %v33
    %62 = vmatprep.subr.mxu0 0.0
    %63 = vmatpush1.msra.mxu0 %v34
    %64 = vmatprep.subr.mxu0 0.0
    %65 = vmatpush1.msra.mxu0 %v35
    %66 = vmatprep.subr.mxu0 0.0
    %67 = vmatpush1.msra.mxu0 %v36
    %68 = vmatprep.subr.mxu0 0.0
    %69 = vmatpush1.msra.mxu0 %v37
    %70 = vmatprep.subr.mxu0 0.0
    %71 = vmatpush1.msra.mxu0 0.0
    %72 = vmatprep.subr.mxu0 0.0
    %73 = vmatpush1.msra.mxu0 0.0
    %74 = vmatprep.subr.mxu0 0.0
    %75 = vmatpush1.msra.mxu0 0.0
    %76 = vmatprep.subr.mxu0 0.0
    %77 = vmatpush1.msra.mxu0 0.0
    %78 = vmatprep.subr.mxu0 0.0
    %79 = vmatpush1.msra.mxu0 0.0
    %80 = vmatprep.subr.mxu0 0.0
    %81 = vmatpush1.msra.mxu0 0.0
    %82 = vmatprep.subr.mxu0 0.0
    %83 = vmatpush1.msra.mxu0 0.0
    %84 = vmatprep.subr.mxu0 0.0
    %85 = vmatpush1.msra.mxu0 0.0
    %86 = vmatprep.subr.mxu0 0.0
    %87 = vmatpush1.msra.mxu0 0.0
    %88 = vmatprep.subr.mxu0 0.0
    %89 = vmatpush1.msra.mxu0 0.0
    %90 = vmatprep.subr.mxu0 0.0
    %91 = vmatpush1.msra.mxu0 0.0
    %92 = vmatprep.subr.mxu0 0.0
    %93 = vmatpush1.msra.mxu0 0.0
    %94 = vmatprep.subr.mxu0 0.0
    %95 = vmatpush1.msra.mxu0 0.0
    %96 = vmatprep.subr.mxu0 0.0
    %97 = vmatpush1.msra.mxu0 0.0
    %98 = vmatprep.subr.mxu0 0.0
    %99 = vmatpush1.msra.mxu0 0.0
    %100 = vmatprep.subr.mxu0 0.0
    %101 = vmatpush1.msra.mxu0 0.0
    %102 = vmatprep.mubr.f32.mxu0 0.0
    %103 = vmatmul.mubr.f32.gmra.mrb[0].mxu0 %v20
    %v104 = vpop.f32.mrb[0].mxu0
    %v105 = vadd.f32 0.0, %v104
    %v106 = vpop.f32.mrb[0].mxu0
    %107 = vmatprep.mubr.f32.mxu0 0.0
    %108 = vmatmul.mubr.f32.gmra.mrb[0].mxu0 %v21
    %v109 = vpop.f32.mrb[0].mxu0
    %v110 = vadd.f32 0.0, %v109
    %v111 = vpop.f32.mrb[0].mxu0
    %112 = vdwg.mxu0
    %v113 = vadd.f32 %v18, %v105
    %v114 = vadd.f32 %v19, %v110
    %115 = vst [vmem:[#allocation2] sm:$0xff] %v113
    %116 = vst [vmem:[#allocation2 + $0x8] sm:$0xff] %v114
    // Predicated region
    $region14: #{unembed.1} parent=1 // pred_check
      %p117 = pneg %p12
    $region15: #{unembed.1} parent=1 // pred_check_branch
      %119 = sbr.rel (%p117) target = $region17
    $region16: #{unembed.1} parent=1 // pred_region
      %v120 = vld [vmem:[#allocation2] sm:$0xff]
      %v121 = vld [vmem:[#allocation2 + $0x8] sm:$0xff]
      %122 = vst [vmem:[#allocation3] sm:$0xff] %v120
      %123 = vst [vmem:[#allocation3 + $0x8] sm:$0xff] %v121
    $region17: #{unembed.1} parent=1 // pred_fallthru
      _
    // Predicated region
    $region18: #{unembed.1} parent=1 // pred_check
      _
    $region19: #{unembed.1} parent=1 // pred_check_branch
      %125 = sbr.rel (0) target = $region21
    $region20: #{unembed.1} parent=1 // pred_region
      %s127 = ssub.s32 256, 256
      %128 = vsyncadd [#allocation4], %s127
      %s129 = sshll.u32 [#allocation3], 4
      %s130 = int_to_ptr.vmem [resolvable:$true] %s129
      %135 = dma.vmem_to_hbm [thread:$0]  %s130, 256, %s2, [#allocation4], 128, 128, 8
    $region21: #{unembed.1} parent=1 // pred_fallthru
      _
    // Predicated region
    $region22: #{unembed.1} parent=1 // pred_check
      _
    $region23: #{unembed.1} parent=1 // pred_check_branch
      %137 = sbr.rel (0) target = $region25
    $region24: #{unembed.1} parent=1 // pred_region
      %138 = dma.done [#allocation4], 256
    $region25: #{unembed.1} parent=1 // pred_fallthru
      _
    %139 = vsyncpa [#allocation4], 1

</llo_original>
